<compile_context>
chip_gen: v7x
topology: tpu7x:2x2x1
jax: 0.10.0
libtpu: 0.0.40
codegen_flags: <defaults>
</compile_context>

<pallas_src>
import math
import functools

import jax
import jax.numpy as jnp
from jax.experimental import pallas as pl
from jax.experimental.pallas import tpu as pltpu

EPS = 1e-5  # BatchNorm2d default eps


def _round_up(n, m):
    return ((n + m - 1) // m) * m


# ------------------------------------------------------------------- kernels --

def tdnn_conv_stats_kernel(x_ref, w_ref, b_ref, z_ref, stats_ref, *,
                           rem, activation):
    """Fused im2col-conv (single MXU matmul) + bias + activation, plus
    per-channel sum / sum-of-squares accumulation for BatchNorm.

    x_ref:     (1, TT, K_pad)  bf16 -- im2col'd input tile
    w_ref:     (K_pad, C_blk)  bf16 -- conv weight as a matrix
    b_ref:     (1, C_blk)      f32
    z_ref:     (1, TT, C_blk)  bf16 -- pre-BN activation tile (output)
    stats_ref: (1, 2, C_blk)   f32  -- [sum, sum_sq], resident across time axis
    rem: number of valid rows in the LAST time tile (0 -> every tile is full)
    """
    ti = pl.program_id(2)
    last = pl.num_programs(2) - 1

    zf = jnp.dot(x_ref[0], w_ref[...], preferred_element_type=jnp.float32)
    zf = zf + b_ref[...]
    if activation == "leakyrelu":
        zf = jnp.where(zf > 0, zf, 0.01 * zf)
    elif activation == "prelu":
        # TODO(synk): PReLU's learned slope is not threaded through; the
        # PyTorch init value 0.25 is used as a constant.
        zf = jnp.where(zf > 0, zf, 0.25 * zf)
    else:  # relu (default)
        zf = jnp.maximum(zf, 0.0)
    z_ref[0] = zf.astype(z_ref.dtype)

    def stats_part(zm):
        return jnp.concatenate(
            [jnp.sum(zm, axis=0, keepdims=True),        # sum
             jnp.sum(zm * zm, axis=0, keepdims=True)],  # sum of squares
            axis=0)                                     # (2, C_blk)

    def accum(part):
        @pl.when(ti == 0)
        def _init():
            stats_ref[0] = part

        @pl.when(ti != 0)
        def _add():
            stats_ref[0] = stats_ref[0] + part

    if rem == 0:
        # Time axis divides evenly: no masking anywhere.
        accum(stats_part(zf))
    else:
        @pl.when(ti != last)
        def _interior():
            accum(stats_part(zf))

        @pl.when(ti == last)
        def _ragged():
            tt = zf.shape[0]
            valid = jax.lax.broadcasted_iota(jnp.int32, (tt, 1), 0) < rem
            accum(stats_part(jnp.where(valid, zf, 0.0)))


def bn_apply_kernel(z_ref, ss_ref, o_ref):
    """Elementwise BatchNorm apply: o = z * scale + shift (per channel)."""
    z = z_ref[...].astype(jnp.float32)
    o_ref[...] = z * ss_ref[0:1, :] + ss_ref[1:2, :]


# ------------------------------------------------------------------- forward --

def time_delay_layer_v4_forward(x, params, *, context_size=5, dilation=1,
                                batch_norm=True, activation="relu",
                                eps=EPS, time_tile=512, bn_row_tile=1024):
    """TimeDelayLayer_v4 forward: (B, 1, T, D) -> (B, 1, new_T, C).

    Conv2d stride is the PyTorch default 1 (the module's `stride` attr is never
    passed to Conv2d).  dropout_p defaults to 0.0 -> no-op.
    """
    assert x.ndim == 4 and x.shape[1] == 1, x.shape
    B, _, T, D = x.shape
    ctx, dil = context_size, dilation
    w, b = params["w"], params["b"]            # (K_pad, C) bf16, (1, C) f32
    K = ctx * D
    K_pad, C = w.shape
    assert K_pad == _round_up(K, 128), (w.shape, K)

    new_T = T - dil * (ctx - 1)
    assert new_T > 0, "sequence too short for this context/dilation"

    # Time tiling (multiple of 8 sublanes).  The last tile may be ragged; Pallas
    # masks the out-of-range output rows, the stats mask handles the rest.
    tt = min(time_tile, _round_up(new_T, 8))
    n_t = pl.cdiv(new_T, tt)
    new_T_pad = n_t * tt
    rem = new_T % tt                        # valid rows in the last tile (0 = full)
    T_pad = new_T_pad + dil * (ctx - 1)

    # Output-channel blocking (>=2 parallel grid slices feed both v7x TCs).
    c_blk = 256 if (C > 256 and C % 256 == 0) else C
    n_c = C // c_blk

    # im2col in the wrapper: ctx shifted time windows stacked along the feature
    # axis, zero-padded K -> K_pad.  Bytes are small next to the z output, and
    # it turns the dilated conv into a single K=128 matmul per tile.
    xb = jnp.squeeze(x, axis=1).astype(jnp.bfloat16)
    xb = jnp.pad(xb, ((0, 0), (0, T_pad - T), (0, 0)))
    xcat = jnp.concatenate(
        [xb[:, c * dil:c * dil + new_T_pad, :] for c in range(ctx)], axis=-1)
    if K_pad > K:
        xcat = jnp.pad(xcat, ((0, 0), (0, 0), (0, K_pad - K)))

    kern = functools.partial(tdnn_conv_stats_kernel, rem=rem,
                             activation=activation)
    z, stats = pl.pallas_call(
        kern,
        grid=(B, n_c, n_t),
        in_specs=[
            pl.BlockSpec((1, tt, K_pad), lambda bi, ci, ti: (bi, ti, 0)),
            pl.BlockSpec((K_pad, c_blk), lambda bi, ci, ti: (0, ci)),
            pl.BlockSpec((1, c_blk), lambda bi, ci, ti: (0, ci)),
        ],
        out_specs=[
            pl.BlockSpec((1, tt, c_blk), lambda bi, ci, ti: (bi, ti, ci)),
            pl.BlockSpec((1, 2, c_blk), lambda bi, ci, ti: (bi, 0, ci)),
        ],
        out_shape=[
            jax.ShapeDtypeStruct((B, new_T, C), jnp.bfloat16),
            jax.ShapeDtypeStruct((B, 2, C), jnp.float32),
        ],
        compiler_params=pltpu.CompilerParams(
            dimension_semantics=("parallel", "parallel", "arbitrary")),
    )(xcat, w, b)

    if not batch_norm:
        y = z.astype(jnp.float32)
    else:
        # Finalize batch statistics (tiny (C,)-sized math), fold gamma/beta
        # into per-channel scale/shift, then apply with a wide mem-bound pass.
        total = jnp.sum(stats, axis=0)                          # (2, C)
        count = float(B * new_T)
        mean = total[0] / count
        var = jnp.maximum(total[1] / count - mean * mean, 0.0)  # biased var
        inv = jax.lax.rsqrt(var + eps)
        scale = params["gamma"] * inv
        shift = params["beta"] - mean * scale
        ss = jnp.stack([scale, shift], axis=0).astype(jnp.float32)   # (2, C)

        rows = B * new_T
        z2 = z.reshape(rows, C)                   # free (contiguous) reshape
        r_tile = min(bn_row_tile, _round_up(rows, 8))
        y2 = pl.pallas_call(
            bn_apply_kernel,
            grid=(pl.cdiv(rows, r_tile),),
            in_specs=[
                pl.BlockSpec((r_tile, C), lambda ri: (ri, 0)),
                pl.BlockSpec((2, C), lambda ri: (0, 0)),
            ],
            out_specs=pl.BlockSpec((r_tile, C), lambda ri: (ri, 0)),
            out_shape=jax.ShapeDtypeStruct((rows, C), jnp.float32),
            compiler_params=pltpu.CompilerParams(
                dimension_semantics=("parallel",)),
        )(z2, ss)
        y = y2.reshape(B, new_T, C)

    # TODO(synk): BatchNorm running_mean/running_var updates (training
    # bookkeeping) and dropout (default p=0.0 -> no-op) are not modeled.
    return y[:, None, :, :]    # == conv_out.transpose(1, 3): (B, 1, new_T, C)


# -------------------------------------------------------------------- params --

def init_params(key, input_dim=23, output_dim=512, context_size=5):
    """PyTorch Conv2d default init (kaiming_uniform(a=sqrt(5)) on weight,
    U(-1/sqrt(fan_in), 1/sqrt(fan_in)) on bias, fan_in = ctx * input_dim).
    The weight is stored as an im2col (K_pad, C) bf16 matrix."""
    kw, kb = jax.random.split(key)
    fan_in = context_size * input_dim
    bound = 1.0 / math.sqrt(fan_in)
    w = jax.random.uniform(kw, (output_dim, 1, context_size, input_dim),
                           jnp.float32, -bound, bound)
    bias = jax.random.uniform(kb, (output_dim,), jnp.float32, -bound, bound)
    K = context_size * input_dim
    K_pad = _round_up(K, 128)
    # (C, 1, ctx, D) -> (K=ctx*D, C), zero-pad K -> K_pad, bf16 for the MXU.
    w_k = jnp.transpose(w[:, 0, :, :].reshape(output_dim, K), (1, 0))
    w_k = jnp.pad(w_k, ((0, K_pad - K), (0, 0))).astype(jnp.bfloat16)
    return {
        "w": w_k,
        "b": bias.reshape(1, output_dim).astype(jnp.float32),
        "gamma": jnp.ones((output_dim,), jnp.float32),   # BatchNorm2d affine
        "beta": jnp.zeros((output_dim,), jnp.float32),
    }


# ----------------------------------------------------------------- reference --

def _reference_forward(x, params, *, context_size, dilation, eps=EPS):
    """Pure-JAX f32 reference (same bf16-rounded weights, f32 math, ReLU+BN)."""
    B, _, T, D = x.shape
    ctx, dil = context_size, dilation
    new_T = T - dil * (ctx - 1)
    K = ctx * D
    w = params["w"].astype(jnp.float32)[:K]              # (K, C)
    b = params["b"][0]
    xb = jnp.squeeze(x, axis=1)
    xcat = jnp.concatenate(
        [xb[:, c * dil:c * dil + new_T, :] for c in range(ctx)], axis=-1)
    z = jnp.maximum(jnp.einsum("btk,kc->btc", xcat, w) + b, 0.0)
    mean = jnp.mean(z, axis=(0, 1))
    var = jnp.mean(jnp.square(z - mean), axis=(0, 1))
    y = (z - mean) * jax.lax.rsqrt(var + eps) * params["gamma"] + params["beta"]
    return y[:, None, :, :]


# ---------------------------------------------------------------------- main --

if __name__ == "__main__":
    B, T = 2, 32
    INPUT_DIM, OUTPUT_DIM = 23, 512
    CONTEXT, DILATION = 5, 1

    key = jax.random.PRNGKey(0)
    k_x, k_p = jax.random.split(key)
    x = jax.random.normal(k_x, (B, 1, T, INPUT_DIM), jnp.float32)
    params = init_params(k_p, INPUT_DIM, OUTPUT_DIM, CONTEXT)

    fwd = jax.jit(functools.partial(time_delay_layer_v4_forward,
                                    context_size=CONTEXT, dilation=DILATION))
    y = fwd(x, params)
    jax.block_until_ready(y)

    new_T = T - DILATION * (CONTEXT - 1)
    assert y.shape == (B, 1, new_T, OUTPUT_DIM), y.shape
    assert bool(jnp.all(jnp.isfinite(y))), "non-finite output"

    # Loose parity vs. an f32 reference (bf16 MXU inputs -> ~1e-2 abs error).
    y_ref = _reference_forward(x, params, context_size=CONTEXT,
                               dilation=DILATION)
    max_err = float(jnp.max(jnp.abs(y.astype(jnp.float32) - y_ref)))
    assert max_err < 0.1, f"max abs error vs reference: {max_err}"

    print("KERNEL_OK")
</pallas_src>

<mosaic_0001>
module attributes {stable_mosaic.version = 11 : i64} {
  func.func @bn_apply_kernel(%arg0: i32, %arg1: memref<56x512xbf16, #tpu.memory_space<vmem>>, %arg2: memref<2x512xf32, #tpu.memory_space<vmem>>, %arg3: memref<56x512xf32, #tpu.memory_space<vmem>>) attributes {dimension_semantics = [#tpu.dimension_semantics<parallel>], iteration_bounds = array<i64: 1>, scalar_prefetch = 0 : i64, scratch_operands = 0 : i64, tpu.core_type = #tpu.core_type<tc>, window_params = [{transform_indices = @transform_0, window_bounds = array<i64: 56, 512>}, {pipeline_mode = #tpu.pipeline_mode<synchronous>, transform_indices = @transform_1, window_bounds = array<i64: 2, 512>}, {transform_indices = @transform_2, window_bounds = array<i64: 56, 512>}]} {
    %c0 = arith.constant 0 : index
    %c0_0 = arith.constant 0 : index
    %0 = vector.load %arg1[%c0, %c0_0] : memref<56x512xbf16, #tpu.memory_space<vmem>>, vector<56x512xbf16>
    %1 = arith.extf %0 : vector<56x512xbf16> to vector<56x512xf32>
    %c0_1 = arith.constant 0 : index
    %c0_2 = arith.constant 0 : index
    %2 = vector.load %arg2[%c0_1, %c0_2] : memref<2x512xf32, #tpu.memory_space<vmem>>, vector<1x512xf32>
    %3 = vector.broadcast %2 : vector<1x512xf32> to vector<56x512xf32>
    %4 = arith.mulf %1, %3 : vector<56x512xf32>
    %c1 = arith.constant 1 : index
    %c0_3 = arith.constant 0 : index
    %5 = vector.load %arg2[%c1, %c0_3] : memref<2x512xf32, #tpu.memory_space<vmem>>, vector<1x512xf32>
    %6 = vector.broadcast %5 : vector<1x512xf32> to vector<56x512xf32>
    %7 = arith.addf %4, %6 : vector<56x512xf32>
    %c0_4 = arith.constant 0 : index
    %c0_5 = arith.constant 0 : index
    %8 = vector.load %arg3[%c0_4, %c0_5] : memref<56x512xf32, #tpu.memory_space<vmem>>, vector<56x512xf32>
    tpu.vector_store %arg3[%c0_4, %c0_5], %7 {strides = array<i32>} : memref<56x512xf32, #tpu.memory_space<vmem>>, vector<56x512xf32>,
    return
  }
  func.func @transform_0(%arg0: i32) -> (i32, i32) {
    %c0_i32 = arith.constant 0 : i32
    %c0_i32_0 = arith.constant 0 : i32
    return %arg0, %c0_i32 : i32, i32
  }
  func.func @transform_1(%arg0: i32) -> (i32, i32) {
    %c0_i32 = arith.constant 0 : i32
    %c0_i32_0 = arith.constant 0 : i32
    %c0_i32_1 = arith.constant 0 : i32
    return %c0_i32, %c0_i32_0 : i32, i32
  }
  func.func @transform_2(%arg0: i32) -> (i32, i32) {
    %c0_i32 = arith.constant 0 : i32
    %c0_i32_0 = arith.constant 0 : i32
    return %arg0, %c0_i32 : i32, i32
  }
}

module attributes {stable_mosaic.version = 11 : i64} {
  func.func @tdnn_conv_stats_kernel(%arg0: i32, %arg1: i32, %arg2: i32, %arg3: memref<1x32x128xbf16, #tpu.memory_space<vmem>>, %arg4: memref<128x256xbf16, #tpu.memory_space<vmem>>, %arg5: memref<1x256xf32, #tpu.memory_space<vmem>>, %arg6: memref<1x32x256xbf16, #tpu.memory_space<vmem>>, %arg7: memref<1x2x256xf32, #tpu.memory_space<vmem>>) attributes {dimension_semantics = [#tpu.dimension_semantics<parallel>, #tpu.dimension_semantics<parallel>, #tpu.dimension_semantics<arbitrary>], iteration_bounds = array<i64: 2, 2, 1>, scalar_prefetch = 0 : i64, scratch_operands = 0 : i64, tpu.core_type = #tpu.core_type<tc>, window_params = [{transform_indices = @transform_0, window_bounds = array<i64: 1, 32, 128>}, {transform_indices = @transform_1, window_bounds = array<i64: 128, 256>}, {transform_indices = @transform_2, window_bounds = array<i64: 1, 256>}, {transform_indices = @transform_3, window_bounds = array<i64: 1, 32, 256>}, {transform_indices = @transform_4, window_bounds = array<i64: 1, 2, 256>}]} {
    %c0 = arith.constant 0 : index
    %c0_0 = arith.constant 0 : index
    %c0_1 = arith.constant 0 : index
    %0 = vector.load %arg3[%c0, %c0_0, %c0_1] : memref<1x32x128xbf16, #tpu.memory_space<vmem>>, vector<1x32x128xbf16>
    %1 = vector.shape_cast %0 : vector<1x32x128xbf16> to vector<32x128xbf16>
    %c0_2 = arith.constant 0 : index
    %c0_3 = arith.constant 0 : index
    %2 = vector.load %arg4[%c0_2, %c0_3] : memref<128x256xbf16, #tpu.memory_space<vmem>>, vector<128x256xbf16>
    %cst = arith.constant dense<0.000000e+00> : vector<32x256xf32>
    %3 = tpu.matmul %1, %2, %cst {dimension_numbers = #tpu.dot_dimension_numbers<[1], [0], [0], [1], [0, 0, 1, 1], [], []>} : vector<32x128xbf16>, vector<128x256xbf16>, vector<32x256xf32> -> vector<32x256xf32>
    %c0_4 = arith.constant 0 : index
    %c0_5 = arith.constant 0 : index
    %4 = vector.load %arg5[%c0_4, %c0_5] : memref<1x256xf32, #tpu.memory_space<vmem>>, vector<1x256xf32>
    %5 = vector.broadcast %4 : vector<1x256xf32> to vector<32x256xf32>
    %6 = arith.addf %3, %5 : vector<32x256xf32>
    %cst_6 = arith.constant 0.000000e+00 : f32
    %7 = vector.broadcast %cst_6 : f32 to vector<32x256xf32>
    %8 = arith.maximumf %6, %7 : vector<32x256xf32>
    %9 = arith.truncf %8 : vector<32x256xf32> to vector<32x256xbf16>
    %c0_7 = arith.constant 0 : index
    %c0_8 = arith.constant 0 : index
    %c0_9 = arith.constant 0 : index
    %10 = vector.load %arg6[%c0_7, %c0_8, %c0_9] : memref<1x32x256xbf16, #tpu.memory_space<vmem>>, vector<1x32x256xbf16>
    %11 = vector.shape_cast %10 : vector<1x32x256xbf16> to vector<32x256xbf16>
    %12 = vector.shape_cast %9 : vector<32x256xbf16> to vector<1x32x256xbf16>
    tpu.vector_store %arg6[%c0_7, %c0_8, %c0_9], %12 {strides = array<i32>} : memref<1x32x256xbf16, #tpu.memory_space<vmem>>, vector<1x32x256xbf16>,
    %c0_i32 = arith.constant 0 : i32
    %13 = arith.cmpi ne, %arg2, %c0_i32 : i32
    %14 = arith.extui %13 : i1 to i32
    %c0_i32_10 = arith.constant 0 : i32
    %15 = arith.cmpi ne, %14, %c0_i32_10 : i32
    scf.if %15 {
      %cst_13 = arith.constant dense<0.000000e+00> : vector<256xf32>
      %19 = vector.multi_reduction <add>, %8, %cst_13 [0] : vector<32x256xf32> to vector<256xf32>
      %20 = vector.shape_cast %19 : vector<256xf32> to vector<1x256xf32>
      %21 = arith.mulf %8, %8 : vector<32x256xf32>
      %cst_14 = arith.constant dense<0.000000e+00> : vector<256xf32>
      %22 = vector.multi_reduction <add>, %21, %cst_14 [0] : vector<32x256xf32> to vector<256xf32>
      %23 = vector.shape_cast %22 : vector<256xf32> to vector<1x256xf32>
      %24 = tpu.concatenate %20, %23 in 0 : vector<1x256xf32>, vector<1x256xf32> -> vector<2x256xf32>
      %c0_i32_15 = arith.constant 0 : i32
      %25 = arith.cmpi eq, %arg2, %c0_i32_15 : i32
      %26 = arith.extui %25 : i1 to i32
      %c0_i32_16 = arith.constant 0 : i32
      %27 = arith.cmpi ne, %26, %c0_i32_16 : i32
      scf.if %27 {
        %c0_19 = arith.constant 0 : index
        %c0_20 = arith.constant 0 : index
        %c0_21 = arith.constant 0 : index
        %31 = vector.load %arg7[%c0_19, %c0_20, %c0_21] : memref<1x2x256xf32, #tpu.memory_space<vmem>>, vector<1x2x256xf32>
        %32 = vector.shape_cast %31 : vector<1x2x256xf32> to vector<2x256xf32>
        %33 = vector.shape_cast %24 : vector<2x256xf32> to vector<1x2x256xf32>
        tpu.vector_store %arg7[%c0_19, %c0_20, %c0_21], %33 {strides = array<i32>} : memref<1x2x256xf32, #tpu.memory_space<vmem>>, vector<1x2x256xf32>,
      } else {
      }
      %c0_i32_17 = arith.constant 0 : i32
      %28 = arith.cmpi ne, %arg2, %c0_i32_17 : i32
      %29 = arith.extui %28 : i1 to i32
      %c0_i32_18 = arith.constant 0 : i32
      %30 = arith.cmpi ne, %29, %c0_i32_18 : i32
      scf.if %30 {
        %c0_19 = arith.constant 0 : index
        %c0_20 = arith.constant 0 : index
        %c0_21 = arith.constant 0 : index
        %31 = vector.load %arg7[%c0_19, %c0_20, %c0_21] : memref<1x2x256xf32, #tpu.memory_space<vmem>>, vector<1x2x256xf32>
        %32 = vector.shape_cast %31 : vector<1x2x256xf32> to vector<2x256xf32>
        %33 = arith.addf %32, %24 : vector<2x256xf32>
        %c0_22 = arith.constant 0 : index
        %c0_23 = arith.constant 0 : index
        %c0_24 = arith.constant 0 : index
        %34 = vector.load %arg7[%c0_22, %c0_23, %c0_24] : memref<1x2x256xf32, #tpu.memory_space<vmem>>, vector<1x2x256xf32>
        %35 = vector.shape_cast %34 : vector<1x2x256xf32> to vector<2x256xf32>
        %36 = vector.shape_cast %33 : vector<2x256xf32> to vector<1x2x256xf32>
        tpu.vector_store %arg7[%c0_22, %c0_23, %c0_24], %36 {strides = array<i32>} : memref<1x2x256xf32, #tpu.memory_space<vmem>>, vector<1x2x256xf32>,
      } else {
      }
    } else {
    }
    %c0_i32_11 = arith.constant 0 : i32
    %16 = arith.cmpi eq, %arg2, %c0_i32_11 : i32
    %17 = arith.extui %16 : i1 to i32
    %c0_i32_12 = arith.constant 0 : i32
    %18 = arith.cmpi ne, %17, %c0_i32_12 : i32
    scf.if %18 {
      %19 = tpu.iota {dimensions = array<i32: 0>} : vector<32x1xi32>
      %c28_i32 = arith.constant 28 : i32
      %20 = vector.broadcast %c28_i32 : i32 to vector<32x1xi32>
      %21 = arith.cmpi slt, %19, %20 : vector<32x1xi32>
      %cst_13 = arith.constant 0.000000e+00 : f32
      %22 = vector.shape_cast %21 : vector<32x1xi1> to vector<32x1xi1>
      %23 = vector.broadcast %22 : vector<32x1xi1> to vector<32x256xi1>
      %24 = vector.broadcast %cst_13 : f32 to vector<32x256xf32>
      %25 = arith.select %23, %8, %24 : vector<32x256xi1>, vector<32x256xf32>
      %cst_14 = arith.constant dense<0.000000e+00> : vector<256xf32>
      %26 = vector.multi_reduction <add>, %25, %cst_14 [0] : vector<32x256xf32> to vector<256xf32>
      %27 = vector.shape_cast %26 : vector<256xf32> to vector<1x256xf32>
      %28 = arith.mulf %25, %25 : vector<32x256xf32>
      %cst_15 = arith.constant dense<0.000000e+00> : vector<256xf32>
      %29 = vector.multi_reduction <add>, %28, %cst_15 [0] : vector<32x256xf32> to vector<256xf32>
      %30 = vector.shape_cast %29 : vector<256xf32> to vector<1x256xf32>
      %31 = tpu.concatenate %27, %30 in 0 : vector<1x256xf32>, vector<1x256xf32> -> vector<2x256xf32>
      %c0_i32_16 = arith.constant 0 : i32
      %32 = arith.cmpi eq, %arg2, %c0_i32_16 : i32
      %33 = arith.extui %32 : i1 to i32
      %c0_i32_17 = arith.constant 0 : i32
      %34 = arith.cmpi ne, %33, %c0_i32_17 : i32
      scf.if %34 {
        %c0_20 = arith.constant 0 : index
        %c0_21 = arith.constant 0 : index
        %c0_22 = arith.constant 0 : index
        %38 = vector.load %arg7[%c0_20, %c0_21, %c0_22] : memref<1x2x256xf32, #tpu.memory_space<vmem>>, vector<1x2x256xf32>
        %39 = vector.shape_cast %38 : vector<1x2x256xf32> to vector<2x256xf32>
        %40 = vector.shape_cast %31 : vector<2x256xf32> to vector<1x2x256xf32>
        tpu.vector_store %arg7[%c0_20, %c0_21, %c0_22], %40 {strides = array<i32>} : memref<1x2x256xf32, #tpu.memory_space<vmem>>, vector<1x2x256xf32>,
      } else {
      }
      %c0_i32_18 = arith.constant 0 : i32
      %35 = arith.cmpi ne, %arg2, %c0_i32_18 : i32
      %36 = arith.extui %35 : i1 to i32
      %c0_i32_19 = arith.constant 0 : i32
      %37 = arith.cmpi ne, %36, %c0_i32_19 : i32
      scf.if %37 {
        %c0_20 = arith.constant 0 : index
        %c0_21 = arith.constant 0 : index
        %c0_22 = arith.constant 0 : index
        %38 = vector.load %arg7[%c0_20, %c0_21, %c0_22] : memref<1x2x256xf32, #tpu.memory_space<vmem>>, vector<1x2x256xf32>
        %39 = vector.shape_cast %38 : vector<1x2x256xf32> to vector<2x256xf32>
        %40 = arith.addf %39, %31 : vector<2x256xf32>
        %c0_23 = arith.constant 0 : index
        %c0_24 = arith.constant 0 : index
        %c0_25 = arith.constant 0 : index
        %41 = vector.load %arg7[%c0_23, %c0_24, %c0_25] : memref<1x2x256xf32, #tpu.memory_space<vmem>>, vector<1x2x256xf32>
        %42 = vector.shape_cast %41 : vector<1x2x256xf32> to vector<2x256xf32>
        %43 = vector.shape_cast %40 : vector<2x256xf32> to vector<1x2x256xf32>
        tpu.vector_store %arg7[%c0_23, %c0_24, %c0_25], %43 {strides = array<i32>} : memref<1x2x256xf32, #tpu.memory_space<vmem>>, vector<1x2x256xf32>,
      } else {
      }
    } else {
    }
    return
  }
  func.func @transform_0(%arg0: i32, %arg1: i32, %arg2: i32) -> (i32, i32, i32) {
    %c0_i32 = arith.constant 0 : i32
    %c0_i32_0 = arith.constant 0 : i32
    return %arg0, %arg2, %c0_i32 : i32, i32, i32
  }
  func.func @transform_1(%arg0: i32, %arg1: i32, %arg2: i32) -> (i32, i32) {
    %c0_i32 = arith.constant 0 : i32
    %c0_i32_0 = arith.constant 0 : i32
    return %c0_i32, %arg1 : i32, i32
  }
  func.func @transform_2(%arg0: i32, %arg1: i32, %arg2: i32) -> (i32, i32) {
    %c0_i32 = arith.constant 0 : i32
    %c0_i32_0 = arith.constant 0 : i32
    return %c0_i32, %arg1 : i32, i32
  }
  func.func @transform_3(%arg0: i32, %arg1: i32, %arg2: i32) -> (i32, i32, i32) {
    %c0_i32 = arith.constant 0 : i32
    return %arg0, %arg2, %arg1 : i32, i32, i32
  }
  func.func @transform_4(%arg0: i32, %arg1: i32, %arg2: i32) -> (i32, i32, i32) {
    %c0_i32 = arith.constant 0 : i32
    %c0_i32_0 = arith.constant 0 : i32
    return %arg0, %c0_i32, %arg1 : i32, i32, i32
  }
}

</mosaic_0001>

<llo_original>
// kernel: time_delay_layer_v4_forward.3
$region0: #{time_delay_layer_v4_forward.3}
  #allocation0 [shape = 'u32[]', space=smem, size = 0x4, offset = 0x4, fixed_abs, tag = 'smem constant byte address 0x4 - core index']
  #allocation1 [shape = 'u32[144,128]{1,0:T(1,128)}', space=vmem, size = 0x12000, scoped, tag = 'internal scratch']
  %s0 = inlined_call_operand.vmem [shape: bf16[56,512], index: 0, kind: input, shape index: {}]
  %s1 = inlined_call_operand.vmem [shape: f32[2,512], index: 1, kind: input, shape index: {}]
  %s2 = inlined_call_operand.vmem [shape: f32[56,512], index: 2, kind: output, shape index: {}]
  %s3 = sld [smem:[#allocation0]]
  $region18: #{time_delay_layer_v4_forward.3} parent=0
    _
  %s5 = ssub.s32 1, %s3
  %s6 = scalar_select 0, %s5, %s3
  // Predicated region
  $region2: #{time_delay_layer_v4_forward.3} parent=0 // pred_check
    _
  $region3: #{time_delay_layer_v4_forward.3} parent=0 // pred_check_branch
    %8 = sbr.rel (0) target = $region5
  $region4: #{time_delay_layer_v4_forward.3} parent=0 // pred_region
    _
  $region5: #{time_delay_layer_v4_forward.3} parent=0 // pred_fallthru
    _
  // Predicated region
  $region6: #{time_delay_layer_v4_forward.3} parent=0 // pred_check
    _
  $region7: #{time_delay_layer_v4_forward.3} parent=0 // pred_check_branch
    %10 = sbr.rel (0) target = $region9
  $region8: #{time_delay_layer_v4_forward.3} parent=0 // pred_region
    _
  $region9: #{time_delay_layer_v4_forward.3} parent=0 // pred_fallthru
    _
  %v11 = vld [vmem:[%s0] sm:$0xff]
  %v12 = vld [vmem:[%s0 + $0x8] sm:$0xff]
  %v13 = vld [vmem:[%s0 + $0x10] sm:$0xff]
  %v14 = vld [vmem:[%s0 + $0x18] sm:$0xff]
  %v15 = vld [vmem:[%s0 + $0x20] sm:$0xff]
  %v16 = vld [vmem:[%s0 + $0x28] sm:$0xff]
  %v17 = vld [vmem:[%s0 + $0x30] sm:$0xff]
  %v18 = vld [vmem:[%s0 + $0x38] sm:$0xff]
  %v19 = vld [vmem:[%s0 + $0x40] sm:$0xff]
  %v20 = vld [vmem:[%s0 + $0x48] sm:$0xff]
  %v21 = vld [vmem:[%s0 + $0x50] sm:$0xff]
  %v22 = vld [vmem:[%s0 + $0x58] sm:$0xff]
  %v23 = vld [vmem:[%s0 + $0x60] sm:$0xff]
  %v24 = vld [vmem:[%s0 + $0x68] sm:$0xff]
  %v25 = vunpack.c.l.bf16 %v11
  %v26 = vunpack.c.h.bf16 %v11
  %v27 = vunpack.c.l.bf16 %v12
  %v28 = vunpack.c.h.bf16 %v12
  %v29 = vunpack.c.l.bf16 %v13
  %v30 = vunpack.c.h.bf16 %v13
  %v31 = vunpack.c.l.bf16 %v14
  %v32 = vunpack.c.h.bf16 %v14
  %v33 = vunpack.c.l.bf16 %v15
  %v34 = vunpack.c.h.bf16 %v15
  %v35 = vunpack.c.l.bf16 %v16
  %v36 = vunpack.c.h.bf16 %v16
  %v37 = vunpack.c.l.bf16 %v17
  %v38 = vunpack.c.h.bf16 %v17
  %v39 = vunpack.c.l.bf16 %v18
  %v40 = vunpack.c.h.bf16 %v18
  %v41 = vunpack.c.l.bf16 %v19
  %v42 = vunpack.c.h.bf16 %v19
  %v43 = vunpack.c.l.bf16 %v20
  %v44 = vunpack.c.h.bf16 %v20
  %v45 = vunpack.c.l.bf16 %v21
  %v46 = vunpack.c.h.bf16 %v21
  %v47 = vunpack.c.l.bf16 %v22
  %v48 = vunpack.c.h.bf16 %v22
  %v49 = vunpack.c.l.bf16 %v23
  %v50 = vunpack.c.h.bf16 %v23
  %v51 = vunpack.c.l.bf16 %v24
  %v52 = vunpack.c.h.bf16 %v24
  %v53 = vld [vmem:[%s1] ss:$2 sm:$0xf]
  %v55 = vlaneseq
  %v56 = vshrl.u32 %v55, 7
  %v57 = vsub.s32 0, %v56
  %v58 = vrot.slane %v53, %v57
  %v59 = vlaneseq
  %v60 = vshrl.u32 %v59, 7
  %v61 = vsub.s32 1, %v60
  %v62 = vrot.slane %v53, %v61
  %v63 = vlaneseq
  %v64 = vshrl.u32 %v63, 7
  %v65 = vsub.s32 2, %v64
  %v66 = vrot.slane %v53, %v65
  %v67 = vlaneseq
  %v68 = vshrl.u32 %v67, 7
  %v69 = vsub.s32 3, %v68
  %v70 = vrot.slane %v53, %v69
  %v75 = vmul.f32 %v25, %v58
  %v76 = vmul.f32 %v26, %v62
  %v77 = vmul.f32 %v27, %v66
  %v78 = vmul.f32 %v28, %v70
  %v79 = vmul.f32 %v29, %v58
  %v80 = vmul.f32 %v30, %v62
  %v81 = vmul.f32 %v31, %v66
  %v82 = vmul.f32 %v32, %v70
  %v83 = vmul.f32 %v33, %v58
  %v84 = vmul.f32 %v34, %v62
  %v85 = vmul.f32 %v35, %v66
  %v86 = vmul.f32 %v36, %v70
  %v87 = vmul.f32 %v37, %v58
  %v88 = vmul.f32 %v38, %v62
  %v89 = vmul.f32 %v39, %v66
  %v90 = vmul.f32 %v40, %v70
  %v91 = vmul.f32 %v41, %v58
  %v92 = vmul.f32 %v42, %v62
  %v93 = vmul.f32 %v43, %v66
  %v94 = vmul.f32 %v44, %v70
  %v95 = vmul.f32 %v45, %v58
  %v96 = vmul.f32 %v46, %v62
  %v97 = vmul.f32 %v47, %v66
  %v98 = vmul.f32 %v48, %v70
  %v99 = vmul.f32 %v49, %v58
  %v100 = vmul.f32 %v50, %v62
  %v101 = vmul.f32 %v51, %v66
  %v102 = vmul.f32 %v52, %v70
  %s103 = scalar_lea.vmem %s1, 1
  %v104 = vld [vmem:[%s103] ss:$2 sm:$0xf]
  %v106 = vlaneseq
  %v107 = vshrl.u32 %v106, 7
  %v108 = vsub.s32 0, %v107
  %v109 = vrot.slane %v104, %v108
  %v110 = vlaneseq
  %v111 = vshrl.u32 %v110, 7
  %v112 = vsub.s32 1, %v111
  %v113 = vrot.slane %v104, %v112
  %v114 = vlaneseq
  %v115 = vshrl.u32 %v114, 7
  %v116 = vsub.s32 2, %v115
  %v117 = vrot.slane %v104, %v116
  %v118 = vlaneseq
  %v119 = vshrl.u32 %v118, 7
  %v120 = vsub.s32 3, %v119
  %v121 = vrot.slane %v104, %v120
  %v126 = vadd.f32 %v75, %v109
  %v127 = vadd.f32 %v76, %v113
  %v128 = vadd.f32 %v77, %v117
  %v129 = vadd.f32 %v78, %v121
  %v130 = vadd.f32 %v79, %v109
  %v131 = vadd.f32 %v80, %v113
  %v132 = vadd.f32 %v81, %v117
  %v133 = vadd.f32 %v82, %v121
  %v134 = vadd.f32 %v83, %v109
  %v135 = vadd.f32 %v84, %v113
  %v136 = vadd.f32 %v85, %v117
  %v137 = vadd.f32 %v86, %v121
  %v138 = vadd.f32 %v87, %v109
  %v139 = vadd.f32 %v88, %v113
  %v140 = vadd.f32 %v89, %v117
  %v141 = vadd.f32 %v90, %v121
  %v142 = vadd.f32 %v91, %v109
  %v143 = vadd.f32 %v92, %v113
  %v144 = vadd.f32 %v93, %v117
  %v145 = vadd.f32 %v94, %v121
  %v146 = vadd.f32 %v95, %v109
  %v147 = vadd.f32 %v96, %v113
  %v148 = vadd.f32 %v97, %v117
  %v149 = vadd.f32 %v98, %v121
  %v150 = vadd.f32 %v99, %v109
  %v151 = vadd.f32 %v100, %v113
  %v152 = vadd.f32 %v101, %v117
  %v153 = vadd.f32 %v102, %v121
  %154 = vst [vmem:[%s2] sm:$0xff] %v126
  %155 = vst [vmem:[%s2 + $0x8] sm:$0xff] %v127
  %156 = vst [vmem:[%s2 + $0x10] sm:$0xff] %v128
  %157 = vst [vmem:[%s2 + $0x18] sm:$0xff] %v129
  %158 = vst [vmem:[%s2 + $0x20] sm:$0xff] %v130
  %159 = vst [vmem:[%s2 + $0x28] sm:$0xff] %v131
  %160 = vst [vmem:[%s2 + $0x30] sm:$0xff] %v132
  %161 = vst [vmem:[%s2 + $0x38] sm:$0xff] %v133
  %162 = vst [vmem:[%s2 + $0x40] sm:$0xff] %v134
  %163 = vst [vmem:[%s2 + $0x48] sm:$0xff] %v135
  %164 = vst [vmem:[%s2 + $0x50] sm:$0xff] %v136
  %165 = vst [vmem:[%s2 + $0x58] sm:$0xff] %v137
  %166 = vst [vmem:[%s2 + $0x60] sm:$0xff] %v138
  %167 = vst [vmem:[%s2 + $0x68] sm:$0xff] %v139
  %168 = vst [vmem:[%s2 + $0x70] sm:$0xff] %v140
  %169 = vst [vmem:[%s2 + $0x78] sm:$0xff] %v141
  %170 = vst [vmem:[%s2 + $0x80] sm:$0xff] %v142
  %171 = vst [vmem:[%s2 + $0x88] sm:$0xff] %v143
  %172 = vst [vmem:[%s2 + $0x90] sm:$0xff] %v144
  %173 = vst [vmem:[%s2 + $0x98] sm:$0xff] %v145
  %174 = vst [vmem:[%s2 + $0xa0] sm:$0xff] %v146
  %175 = vst [vmem:[%s2 + $0xa8] sm:$0xff] %v147
  %176 = vst [vmem:[%s2 + $0xb0] sm:$0xff] %v148
  %177 = vst [vmem:[%s2 + $0xb8] sm:$0xff] %v149
  %178 = vst [vmem:[%s2 + $0xc0] sm:$0xff] %v150
  %179 = vst [vmem:[%s2 + $0xc8] sm:$0xff] %v151
  %180 = vst [vmem:[%s2 + $0xd0] sm:$0xff] %v152
  %181 = vst [vmem:[%s2 + $0xd8] sm:$0xff] %v153
  // Predicated region
  $region10: #{time_delay_layer_v4_forward.3} parent=0 // pred_check
    _
  $region11: #{time_delay_layer_v4_forward.3} parent=0 // pred_check_branch
    %183 = sbr.rel (0) target = $region13
  $region12: #{time_delay_layer_v4_forward.3} parent=0 // pred_region
    _
  $region13: #{time_delay_layer_v4_forward.3} parent=0 // pred_fallthru
    _
  // Predicated region
  $region14: #{time_delay_layer_v4_forward.3} parent=0 // pred_check
    _
  $region15: #{time_delay_layer_v4_forward.3} parent=0 // pred_check_branch
    %185 = sbr.rel (0) target = $region17
  $region16: #{time_delay_layer_v4_forward.3} parent=0 // pred_region
    _
  $region17: #{time_delay_layer_v4_forward.3} parent=0 // pred_fallthru
    _

// kernel: time_delay_layer_v4_forward.2
$region0: #{time_delay_layer_v4_forward.2}
  #allocation0 [shape = 'u32[]', space=smem, size = 0x4, offset = 0x4, fixed_abs, tag = 'smem constant byte address 0x4 - core index']
  #allocation1 [shape = 'u32[144,128]{1,0:T(1,128)}', space=vmem, size = 0x12000, scoped, tag = 'internal scratch']
  %s0 = inlined_call_operand.vmem [shape: bf16[2,32,128], index: 0, kind: input, shape index: {}]
  %s1 = inlined_call_operand.vmem [shape: bf16[128,512], index: 1, kind: input, shape index: {}]
  %s2 = inlined_call_operand.vmem [shape: f32[1,512], index: 2, kind: input, shape index: {}]
  %s3 = inlined_call_operand.vmem [shape: bf16[2,28,512], index: 3, kind: output, shape index: {0}]
  %s4 = inlined_call_operand.vmem [shape: f32[2,2,512], index: 4, kind: output, shape index: {1}]
  %5 = xla_tuple %s3, %s4
  %s6 = sld [smem:[#allocation0]]
  $region141: #{time_delay_layer_v4_forward.2} parent=0
    _
  %s8 = ssub.s32 1, %s6
  %s9 = scalar_select 0, %s8, %s6
  $region1: #{time_delay_layer_v4_forward.2} parent=0
    #allocation2 [shape = 'u8[131072]{0}', space=vmem, size = 0x20000, scoped, tag = 'input window, operand 1']
    #allocation3 [shape = 'u8[32768]{0}', space=vmem, size = 0x8000, scoped, tag = 'output window, operand 0']
    loop: start=0, step=1, limit=6
    $region2: #{time_delay_layer_v4_forward.2} parent=1 // loop_pre_header
      _
    $region3: #{time_delay_layer_v4_forward.2} parent=1 // loop_header
      %s11 = sphi 0, %s15
      %p12 = scmp.ge.s32.totalorder %s11, 6
      %s18 = sphi 0, %s37
      %s19 = sphi 0, %s33
      %s20 = sphi 0, %s29
      %s21 = sphi 0, %s18
      %s22 = sphi 0, %s19
      %s23 = sphi 0, %s20
      %s24 = sphi 0, %s21
      %s25 = sphi 0, %s22
      %s26 = sphi 0, %s23
      %s42 = sphi 0, %s44
      %s45 = sphi 0, %s42
      %s46 = sphi 0, %s45
      %s62 = sphi 0, %s46
      %s68 = sphi 0, %s70
      %s71 = sphi 0, %s68
      %s72 = sphi 0, %s71
      %s88 = sphi 0, %s72
      %s94 = sphi 0, %s96
      %s97 = sphi 0, %s94
      %s98 = sphi 0, %s97
      %s114 = sphi 0, %s98
      %s124 = sphi 0, %s126
      %s127 = sphi 0, %s124
      %s128 = sphi 0, %s127
      %s144 = sphi 0, %s128
      %s152 = sphi 0, %s154
      %s155 = sphi 0, %s152
      %s156 = sphi 0, %s155
      %s172 = sphi 0, %s156
    $region4: #{time_delay_layer_v4_forward.2} parent=1 // loop_header_branch
      %14 = sbr.rel (%p12) target = $region8
    $region5: #{time_delay_layer_v4_forward.2} parent=1 // loop_body
      %s16 = ssub.s32 %s11, 1
      %s17 = ssub.s32 %s11, 2
      %s27 = sadd.s32 1, %s20
      %p28 = scmp.ge.s32.totalorder %s27, 1
      %s29 = scalar_select %p28, 0, %s27
      %s30 = sadd.s32 1, %s19
      %s31 = scalar_select %p28, %s30, %s19
      %p32 = scmp.ge.s32.totalorder %s31, 2
      %s33 = scalar_select %p32, 0, %s31
      %s34 = sadd.s32 1, %s18
      %s35 = scalar_select %p32, %s34, %s18
      %p36 = scmp.ge.s32.totalorder %s35, 2
      %s37 = scalar_select %p36, 0, %s35
      %s38 = ssub.s32 %s18, %s37
      %s39 = ssub.s32 %s20, %s29
      %s40 = sor.u32 %s38, %s39
      %p41 = scmp.eq.s32.totalorder %s40, 0
      %s43 = sadd.s32 %s42, 1
      %s44 = scalar_select %p41, %s42, %s43
      %p47 = pneg %p41
      %p48 = scmp.eq.s32.totalorder %s11, 3
      %p49 = por %p47, %p48
      %p50 = scmp.ne.s32.totalorder %s42, %s45
      %p51 = scmp.eq.s32.totalorder %s11, 0
      %p52 = por %p50, %p51
      %p53 = scmp.ne.s32.totalorder %s42, %s45
      %p54 = scmp.eq.s32.totalorder %s16, 3
      %p55 = por %p53, %p54
      %p56 = scmp.ne.s32.totalorder %s45, %s46
      %p57 = scmp.eq.s32.totalorder %s16, 0
      %p58 = por %p56, %p57
      %p59 = scmp.ne.s32.totalorder %s45, %s46
      %p60 = scmp.eq.s32.totalorder %s17, 3
      %p61 = por %p59, %p60
      %p63 = scmp.ne.s32.totalorder %s46, %s62
      %p64 = scmp.eq.s32.totalorder %s17, 0
      %p65 = por %p63, %p64
      %s66 = ssub.s32 %s19, %s33
      %p67 = scmp.eq.s32.totalorder %s66, 0
      %s69 = sadd.s32 %s68, 1
      %s70 = scalar_select %p67, %s68, %s69
      %p73 = pneg %p67
      %p74 = scmp.eq.s32.totalorder %s11, 3
      %p75 = por %p73, %p74
      %p76 = scmp.ne.s32.totalorder %s68, %s71
      %p77 = scmp.eq.s32.totalorder %s11, 0
      %p78 = por %p76, %p77
      %p79 = scmp.ne.s32.totalorder %s68, %s71
      %p80 = scmp.eq.s32.totalorder %s16, 3
      %p81 = por %p79, %p80
      %p82 = scmp.ne.s32.totalorder %s71, %s72
      %p83 = scmp.eq.s32.totalorder %s16, 0
      %p84 = por %p82, %p83
      %p85 = scmp.ne.s32.totalorder %s71, %s72
      %p86 = scmp.eq.s32.totalorder %s17, 3
      %p87 = por %p85, %p86
      %p89 = scmp.ne.s32.totalorder %s72, %s88
      %p90 = scmp.eq.s32.totalorder %s17, 0
      %p91 = por %p89, %p90
      %s92 = ssub.s32 %s19, %s33
      %p93 = scmp.eq.s32.totalorder %s92, 0
      %s95 = sadd.s32 %s94, 1
      %s96 = scalar_select %p93, %s94, %s95
      %p99 = pneg %p93
      %p100 = scmp.eq.s32.totalorder %s11, 3
      %p101 = por %p99, %p100
      %p102 = scmp.ne.s32.totalorder %s94, %s97
      %p103 = scmp.eq.s32.totalorder %s11, 0
      %p104 = por %p102, %p103
      %p105 = scmp.ne.s32.totalorder %s94, %s97
      %p106 = scmp.eq.s32.totalorder %s16, 3
      %p107 = por %p105, %p106
      %p108 = scmp.ne.s32.totalorder %s97, %s98
      %p109 = scmp.eq.s32.totalorder %s16, 0
      %p110 = por %p108, %p109
      %p111 = scmp.ne.s32.totalorder %s97, %s98
      %p112 = scmp.eq.s32.totalorder %s17, 3
      %p113 = por %p111, %p112
      %p115 = scmp.ne.s32.totalorder %s98, %s114
      %p116 = scmp.eq.s32.totalorder %s17, 0
      %p117 = por %p115, %p116
      %s118 = ssub.s32 %s18, %s37
      %s119 = ssub.s32 %s20, %s29
      %s120 = sor.u32 %s118, %s119
      %s121 = ssub.s32 %s19, %s33
      %s122 = sor.u32 %s120, %s121
      %p123 = scmp.eq.s32.totalorder %s122, 0
      %s125 = sadd.s32 %s124, 1
      %s126 = scalar_select %p123, %s124, %s125
      %p129 = pneg %p123
      %p130 = scmp.eq.s32.totalorder %s11, 3
      %p131 = por %p129, %p130
      %p132 = scmp.ne.s32.totalorder %s124, %s127
      %p133 = scmp.eq.s32.totalorder %s11, 0
      %p134 = por %p132, %p133
      %p135 = scmp.ne.s32.totalorder %s124, %s127
      %p136 = scmp.eq.s32.totalorder %s16, 3
      %p137 = por %p135, %p136
      %p138 = scmp.ne.s32.totalorder %s127, %s128
      %p139 = scmp.eq.s32.totalorder %s16, 0
      %p140 = por %p138, %p139
      %p141 = scmp.ne.s32.totalorder %s127, %s128
      %p142 = scmp.eq.s32.totalorder %s17, 3
      %p143 = por %p141, %p142
      %p145 = scmp.ne.s32.totalorder %s128, %s144
      %p146 = scmp.eq.s32.totalorder %s17, 0
      %p147 = por %p145, %p146
      %s148 = ssub.s32 %s18, %s37
      %s149 = ssub.s32 %s19, %s33
      %s150 = sor.u32 %s148, %s149
      %p151 = scmp.eq.s32.totalorder %s150, 0
      %s153 = sadd.s32 %s152, 1
      %s154 = scalar_select %p151, %s152, %s153
      %p157 = pneg %p151
      %p158 = scmp.eq.s32.totalorder %s11, 3
      %p159 = por %p157, %p158
      %p160 = scmp.ne.s32.totalorder %s152, %s155
      %p161 = scmp.eq.s32.totalorder %s11, 0
      %p162 = por %p160, %p161
      %p163 = scmp.ne.s32.totalorder %s152, %s155
      %p164 = scmp.eq.s32.totalorder %s16, 3
      %p165 = por %p163, %p164
      %p166 = scmp.ne.s32.totalorder %s155, %s156
      %p167 = scmp.eq.s32.totalorder %s16, 0
      %p168 = por %p166, %p167
      %p169 = scmp.ne.s32.totalorder %s155, %s156
      %p170 = scmp.eq.s32.totalorder %s17, 3
      %p171 = por %p169, %p170
      %p173 = scmp.ne.s32.totalorder %s156, %s172
      %p174 = scmp.eq.s32.totalorder %s17, 0
      %p175 = por %p173, %p174
      %p176 = scmp.le.s32.totalorder 1, %s11
      %p177 = scmp.lt.s32.totalorder %s11, 5
      %p178 = pnand %p176, %p177
      %p179 = pneg %p178
      // Predicated region
      $region9: #{time_delay_layer_v4_forward.2} parent=5 // pred_check
        _
      $region10: #{time_delay_layer_v4_forward.2} parent=5 // pred_check_branch
        %181 = sbr.rel (%p178) target = $region12
      $region11: #{time_delay_layer_v4_forward.2} parent=5 // pred_region
        %s182 = ssub.s32 %s11, 1
      $region12: #{time_delay_layer_v4_forward.2} parent=5 // pred_fallthru
        _
      %p183 = scmp.lt.s32.totalorder %s11, 4
      // Predicated region
      $region13: #{time_delay_layer_v4_forward.2} parent=5 // pred_check
        %p184 = pneg %p183
      $region14: #{time_delay_layer_v4_forward.2} parent=5 // pred_check_branch
        %186 = sbr.rel (%p184) target = $region16
      $region15: #{time_delay_layer_v4_forward.2} parent=5 // pred_region
        // Predicated region
        $region17: #{time_delay_layer_v4_forward.2} parent=15 // pred_check
          %p187 = pneg %p52
        $region18: #{time_delay_layer_v4_forward.2} parent=15 // pred_check_branch
          %189 = sbr.rel (%p187) target = $region20
        $region19: #{time_delay_layer_v4_forward.2} parent=15 // pred_region
          %s190 = smul.u32 4, %s20
          %p191 = scmp.lt.s32.totalorder %s18, 1
          %s192 = scalar_select %p191, %s18, 1
          %p193 = scmp.lt.s32.totalorder %s190, 3
          %s194 = scalar_select %p193, %s190, 3
          %s195 = smul.addr %s192, 4
          %s196 = sadd.s32 %s194, %s195
          %s197 = smul.addr %s196, 4
          %s198 = scalar_lea.vmem %s0, %s197
          %s199 = smul.u32 4, %s20
        $region20: #{time_delay_layer_v4_forward.2} parent=15 // pred_fallthru
          _
        // Predicated region
        $region21: #{time_delay_layer_v4_forward.2} parent=15 // pred_check
          %p200 = pneg %p78
        $region22: #{time_delay_layer_v4_forward.2} parent=15 // pred_check_branch
          %202 = sbr.rel (%p200) target = $region24
        $region23: #{time_delay_layer_v4_forward.2} parent=15 // pred_region
          %s203 = sand.u32 %s68, 1
          %s204 = sand.u32 %s68, 1
          %s205 = smul.addr %s204, 128
          %s206 = scalar_lea.vmem [#allocation2], %s205
          %s207 = smul.u32 2, %s19
          %s208 = smul.addr %s207, 4
          %s209 = scalar_lea.vmem %s1, %s208
          // Predicated region
          $region25: #{time_delay_layer_v4_forward.2} parent=23 // pred_check
            _
          $region26: #{time_delay_layer_v4_forward.2} parent=23 // pred_check_branch
            %211 = sbr.rel (0) target = $region28
          $region27: #{time_delay_layer_v4_forward.2} parent=23 // pred_region
            // Predicated region
            $region29: #{time_delay_layer_v4_forward.2} parent=27 // pred_check
              _
            $region30: #{time_delay_layer_v4_forward.2} parent=27 // pred_check_branch
              %213 = sbr.rel (0) target = $region32
            $region31: #{time_delay_layer_v4_forward.2} parent=27 // pred_region
              // Predicated region
              $region44: #{time_delay_layer_v4_forward.2} parent=31 // pred_check
                _
              $region45: #{time_delay_layer_v4_forward.2} parent=31 // pred_check_branch
                %258 = sbr.rel (0) target = $region47
              $region46: #{time_delay_layer_v4_forward.2} parent=31 // pred_region
                loop: start=0, step=1, limit=1
                $region48: #{time_delay_layer_v4_forward.2} parent=46 // loop_pre_header
                  _
                $region49: #{time_delay_layer_v4_forward.2} parent=46 // loop_header
                  %s260 = sphi 0, %s264
                  %p261 = scmp.ge.s32.totalorder %s260, 1
                  %s265 = sphi %s209, %s209
                  %s266 = sphi %s206, %s206
                $region50: #{time_delay_layer_v4_forward.2} parent=46 // loop_header_branch
                  %263 = sbr.rel (%p261) target = $region54
                $region51: #{time_delay_layer_v4_forward.2} parent=46 // loop_body
                  %v267 = vld [vmem:[%s265] sm:$0xff]
                  %268 = vst [vmem:[%s266] sm:$0xff] %v267
                  %v269 = vld [vmem:[%s265 + $0x10] sm:$0xff]
                  %270 = vst [vmem:[%s266 + $0x8] sm:$0xff] %v269
                  %v271 = vld [vmem:[%s265 + $0x20] sm:$0xff]
                  %272 = vst [vmem:[%s266 + $0x10] sm:$0xff] %v271
                  %v273 = vld [vmem:[%s265 + $0x30] sm:$0xff]
                  %274 = vst [vmem:[%s266 + $0x18] sm:$0xff] %v273
                  %v275 = vld [vmem:[%s265 + $0x40] sm:$0xff]
                  %276 = vst [vmem:[%s266 + $0x20] sm:$0xff] %v275
                  %v277 = vld [vmem:[%s265 + $0x50] sm:$0xff]
                  %278 = vst [vmem:[%s266 + $0x28] sm:$0xff] %v277
                  %v279 = vld [vmem:[%s265 + $0x60] sm:$0xff]
                  %280 = vst [vmem:[%s266 + $0x30] sm:$0xff] %v279
                  %v281 = vld [vmem:[%s265 + $0x70] sm:$0xff]
                  %282 = vst [vmem:[%s266 + $0x38] sm:$0xff] %v281
                  %v283 = vld [vmem:[%s265 + $0x80] sm:$0xff]
                  %284 = vst [vmem:[%s266 + $0x40] sm:$0xff] %v283
                  %v285 = vld [vmem:[%s265 + $0x90] sm:$0xff]
                  %286 = vst [vmem:[%s266 + $0x48] sm:$0xff] %v285
                  %v287 = vld [vmem:[%s265 + $0xa0] sm:$0xff]
                  %288 = vst [vmem:[%s266 + $0x50] sm:$0xff] %v287
                  %v289 = vld [vmem:[%s265 + $0xb0] sm:$0xff]
                  %290 = vst [vmem:[%s266 + $0x58] sm:$0xff] %v289
                  %v291 = vld [vmem:[%s265 + $0xc0] sm:$0xff]
                  %292 = vst [vmem:[%s266 + $0x60] sm:$0xff] %v291
                  %v293 = vld [vmem:[%s265 + $0xd0] sm:$0xff]
                  %294 = vst [vmem:[%s266 + $0x68] sm:$0xff] %v293
                  %v295 = vld [vmem:[%s265 + $0xe0] sm:$0xff]
                  %296 = vst [vmem:[%s266 + $0x70] sm:$0xff] %v295
                  %v297 = vld [vmem:[%s265 + $0xf0] sm:$0xff]
                  %298 = vst [vmem:[%s266 + $0x78] sm:$0xff] %v297
                $region52: #{time_delay_layer_v4_forward.2} parent=46 // loop_footer
                  %s264 = sadd.s32 1, %s260
                $region53: #{time_delay_layer_v4_forward.2} parent=46 // loop_footer_branch
                  %259 = sbr.rel target = $region49
                $region54: #{time_delay_layer_v4_forward.2} parent=46 // loop_exit
                  _
              $region47: #{time_delay_layer_v4_forward.2} parent=31 // pred_fallthru
                _
              // Predicated region
              $region55: #{time_delay_layer_v4_forward.2} parent=31 // pred_check
                _
              $region56: #{time_delay_layer_v4_forward.2} parent=31 // pred_check_branch
                %300 = sbr.rel target = $region58
              $region57: #{time_delay_layer_v4_forward.2} parent=31 // pred_region
                _
              $region58: #{time_delay_layer_v4_forward.2} parent=31 // pred_fallthru
                _
            $region32: #{time_delay_layer_v4_forward.2} parent=27 // pred_fallthru
              _
            // Predicated region
            $region33: #{time_delay_layer_v4_forward.2} parent=27 // pred_check
              _
            $region34: #{time_delay_layer_v4_forward.2} parent=27 // pred_check_branch
              %215 = sbr.rel target = $region36
            $region35: #{time_delay_layer_v4_forward.2} parent=27 // pred_region
              loop: start=0, step=1, limit=1
              $region37: #{time_delay_layer_v4_forward.2} parent=35 // loop_pre_header
                _
              $region38: #{time_delay_layer_v4_forward.2} parent=35 // loop_header
                %s218 = sphi 0, %s222
                %p219 = scmp.ge.s32.totalorder %s218, 1
                %s223 = sphi %s209, %s209
                %s224 = sphi %s206, %s206
              $region39: #{time_delay_layer_v4_forward.2} parent=35 // loop_header_branch
                %221 = sbr.rel (%p219) target = $region43
              $region40: #{time_delay_layer_v4_forward.2} parent=35 // loop_body
                %v225 = vld [vmem:[%s223] sm:$0xff]
                %226 = vst [vmem:[%s224] sm:$0xff] %v225
                %v227 = vld [vmem:[%s223 + $0x10] sm:$0xff]
                %228 = vst [vmem:[%s224 + $0x8] sm:$0xff] %v227
                %v229 = vld [vmem:[%s223 + $0x20] sm:$0xff]
                %230 = vst [vmem:[%s224 + $0x10] sm:$0xff] %v229
                %v231 = vld [vmem:[%s223 + $0x30] sm:$0xff]
                %232 = vst [vmem:[%s224 + $0x18] sm:$0xff] %v231
                %v233 = vld [vmem:[%s223 + $0x40] sm:$0xff]
                %234 = vst [vmem:[%s224 + $0x20] sm:$0xff] %v233
                %v235 = vld [vmem:[%s223 + $0x50] sm:$0xff]
                %236 = vst [vmem:[%s224 + $0x28] sm:$0xff] %v235
                %v237 = vld [vmem:[%s223 + $0x60] sm:$0xff]
                %238 = vst [vmem:[%s224 + $0x30] sm:$0xff] %v237
                %v239 = vld [vmem:[%s223 + $0x70] sm:$0xff]
                %240 = vst [vmem:[%s224 + $0x38] sm:$0xff] %v239
                %v241 = vld [vmem:[%s223 + $0x80] sm:$0xff]
                %242 = vst [vmem:[%s224 + $0x40] sm:$0xff] %v241
                %v243 = vld [vmem:[%s223 + $0x90] sm:$0xff]
                %244 = vst [vmem:[%s224 + $0x48] sm:$0xff] %v243
                %v245 = vld [vmem:[%s223 + $0xa0] sm:$0xff]
                %246 = vst [vmem:[%s224 + $0x50] sm:$0xff] %v245
                %v247 = vld [vmem:[%s223 + $0xb0] sm:$0xff]
                %248 = vst [vmem:[%s224 + $0x58] sm:$0xff] %v247
                %v249 = vld [vmem:[%s223 + $0xc0] sm:$0xff]
                %250 = vst [vmem:[%s224 + $0x60] sm:$0xff] %v249
                %v251 = vld [vmem:[%s223 + $0xd0] sm:$0xff]
                %252 = vst [vmem:[%s224 + $0x68] sm:$0xff] %v251
                %v253 = vld [vmem:[%s223 + $0xe0] sm:$0xff]
                %254 = vst [vmem:[%s224 + $0x70] sm:$0xff] %v253
                %v255 = vld [vmem:[%s223 + $0xf0] sm:$0xff]
                %256 = vst [vmem:[%s224 + $0x78] sm:$0xff] %v255
              $region41: #{time_delay_layer_v4_forward.2} parent=35 // loop_footer
                %s222 = sadd.s32 1, %s218
              $region42: #{time_delay_layer_v4_forward.2} parent=35 // loop_footer_branch
                %217 = sbr.rel target = $region38
              $region43: #{time_delay_layer_v4_forward.2} parent=35 // loop_exit
                _
            $region36: #{time_delay_layer_v4_forward.2} parent=27 // pred_fallthru
              _
          $region28: #{time_delay_layer_v4_forward.2} parent=23 // pred_fallthru
            _
          %301 = vnop
        $region24: #{time_delay_layer_v4_forward.2} parent=15 // pred_fallthru
          _
        // Predicated region
        $region59: #{time_delay_layer_v4_forward.2} parent=15 // pred_check
          %p302 = pneg %p104
        $region60: #{time_delay_layer_v4_forward.2} parent=15 // pred_check_branch
          %304 = sbr.rel (%p302) target = $region62
        $region61: #{time_delay_layer_v4_forward.2} parent=15 // pred_region
          %s305 = smul.u32 2, %s19
          %p306 = scmp.lt.s32.totalorder %s305, 3
          %s307 = scalar_select %p306, %s305, 3
          %s308 = scalar_lea.vmem %s2, %s307
          %s309 = smul.u32 2, %s19
        $region62: #{time_delay_layer_v4_forward.2} parent=15 // pred_fallthru
          _
      $region16: #{time_delay_layer_v4_forward.2} parent=5 // pred_fallthru
        _
      %p310 = scmp.le.s32.totalorder 1, %s11
      %p311 = scmp.lt.s32.totalorder %s11, 5
      %p312 = pnand %p310, %p311
      %p313 = pneg %p312
      // Predicated region
      $region63: #{time_delay_layer_v4_forward.2} parent=5 // pred_check
        _
      $region64: #{time_delay_layer_v4_forward.2} parent=5 // pred_check_branch
        %315 = sbr.rel (%p312) target = $region66
      $region65: #{time_delay_layer_v4_forward.2} parent=5 // pred_region
        %s316 = ssub.s32 %s11, 1
        %s317 = sand.u32 %s71, 1
        %s318 = sand.u32 %s71, 1
        %s319 = smul.addr %s318, 128
        %s320 = scalar_lea.vmem [#allocation2], %s319
        // Predicated region
        $region67: #{time_delay_layer_v4_forward.2} parent=65 // pred_check
          %p321 = pneg %p84
        $region68: #{time_delay_layer_v4_forward.2} parent=65 // pred_check_branch
          %323 = sbr.rel (%p321) target = $region70
        $region69: #{time_delay_layer_v4_forward.2} parent=65 // pred_region
          _
        $region70: #{time_delay_layer_v4_forward.2} parent=65 // pred_fallthru
          _
        %s324 = smul.u32 4, %s23
        %p325 = scmp.lt.s32.totalorder %s21, 1
        %s326 = scalar_select %p325, %s21, 1
        %p327 = scmp.lt.s32.totalorder %s324, 3
        %s328 = scalar_select %p327, %s324, 3
        %s329 = smul.addr %s326, 4
        %s330 = sadd.s32 %s328, %s329
        %s331 = smul.addr %s330, 4
        %s332 = scalar_lea.vmem %s0, %s331
        %p333 = pneg %p58
        %p334 = pneg %p55
        %s335 = sand.u32 %s71, 1
        %s336 = sand.u32 %s71, 1
        %s337 = smul.addr %s336, 128
        %s338 = scalar_lea.vmem [#allocation2], %s337
        %p339 = pneg %p84
        %p340 = pneg %p81
        %s341 = smul.u32 2, %s22
        %p342 = scmp.lt.s32.totalorder %s341, 3
        %s343 = scalar_select %p342, %s341, 3
        %s344 = scalar_lea.vmem %s2, %s343
        %p345 = pneg %p110
        %p346 = pneg %p107
        %p347 = pneg %p140
        %p348 = pneg %p137
        %s349 = sand.u32 %s127, 1
        %s350 = sand.u32 %s127, 1
        %s351 = smul.addr %s350, 32
        %s352 = scalar_lea.vmem [#allocation3], %s351
        %p353 = pneg %p168
        %p354 = pneg %p165
        %s355 = smul.u32 2, %s22
        %p356 = scmp.lt.s32.totalorder %s21, 1
        %s357 = scalar_select %p356, %s21, 1
        %p358 = scmp.lt.s32.totalorder %s355, 3
        %s359 = scalar_select %p358, %s355, 3
        %s360 = smul.addr %s357, 4
        %s361 = sadd.s32 %s359, %s360
        %s362 = smul.addr %s361, 2
        %s363 = scalar_lea.vmem %s4, %s362
        %s364 = smul.u32 4, %s23
        %p365 = scmp.lt.s32.totalorder %s21, 1
        %s366 = scalar_select %p365, %s21, 1
        %p367 = scmp.lt.s32.totalorder %s364, 3
        %s368 = scalar_select %p367, %s364, 3
        %s369 = smul.addr %s366, 4
        %s370 = sadd.s32 %s368, %s369
        %s371 = smul.addr %s370, 4
        %s372 = scalar_lea.vmem %s0, %s371
        %s373 = smul.u32 4, %s23
        %s374 = smul.u32 2, %s22
        %s375 = smul.u32 2, %s22
        %p376 = scmp.lt.s32.totalorder %s375, 3
        %s377 = scalar_select %p376, %s375, 3
        %s378 = scalar_lea.vmem %s2, %s377
        %s379 = smul.u32 2, %s22
        %s380 = smul.u32 4, %s23
        %s381 = smul.u32 2, %s22
        %s382 = smul.u32 2, %s22
        %p383 = scmp.lt.s32.totalorder %s21, 1
        %s384 = scalar_select %p383, %s21, 1
        %p385 = scmp.lt.s32.totalorder %s382, 3
        %s386 = scalar_select %p385, %s382, 3
        %s387 = smul.addr %s384, 4
        %s388 = sadd.s32 %s386, %s387
        %s389 = smul.addr %s388, 2
        %s390 = scalar_lea.vmem %s4, %s389
        %s391 = smul.u32 2, %s22
        %v393 = vld [vmem:[%s372] sm:$0xf]
        %v394 = vld [vmem:[%s372 + $0x4] sm:$0xf]
        %v395 = vld [vmem:[%s372 + $0x8] sm:$0xf]
        %v396 = vld [vmem:[%s372 + $0xc] sm:$0xf]
        %v397 = vld [vmem:[%s320] sm:$0xff]
        %v398 = vld [vmem:[%s320 + $0x8] sm:$0xff]
        %v399 = vld [vmem:[%s320 + $0x10] sm:$0xff]
        %v400 = vld [vmem:[%s320 + $0x18] sm:$0xff]
        %v401 = vld [vmem:[%s320 + $0x20] sm:$0xff]
        %v402 = vld [vmem:[%s320 + $0x28] sm:$0xff]
        %v403 = vld [vmem:[%s320 + $0x30] sm:$0xff]
        %v404 = vld [vmem:[%s320 + $0x38] sm:$0xff]
        %v405 = vld [vmem:[%s320 + $0x40] sm:$0xff]
        %v406 = vld [vmem:[%s320 + $0x48] sm:$0xff]
        %v407 = vld [vmem:[%s320 + $0x50] sm:$0xff]
        %v408 = vld [vmem:[%s320 + $0x58] sm:$0xff]
        %v409 = vld [vmem:[%s320 + $0x60] sm:$0xff]
        %v410 = vld [vmem:[%s320 + $0x68] sm:$0xff]
        %v411 = vld [vmem:[%s320 + $0x70] sm:$0xff]
        %v412 = vld [vmem:[%s320 + $0x78] sm:$0xff]
        %v413 = vld [vmem:[%s378] sm:$0x3]
        %v415 = vlaneseq
        %v416 = vshrl.u32 %v415, 7
        %v417 = vsub.s32 0, %v416
        %v418 = vrot.slane %v413, %v417
        %v419 = vlaneseq
        %v420 = vshrl.u32 %v419, 7
        %v421 = vsub.s32 1, %v420
        %v422 = vrot.slane %v413, %v421
        %v429 = vunpack.c.l.b16 %v393
        %v430 = vunpack.c.l.b16 %v394
        %v431 = vunpack.c.l.b16 %v395
        %v432 = vunpack.c.l.b16 %v396
        %v433 = vpack.c.b16 %v430, %v429
        %v434 = vpack.c.b16 %v432, %v431
        %v453 = vunpack.c.l.b16 %v397
        %v454 = vunpack.c.h.b16 %v397
        %v455 = vunpack.c.l.b16 %v398
        %v456 = vunpack.c.h.b16 %v398
        %v457 = vunpack.c.l.b16 %v399
        %v458 = vunpack.c.h.b16 %v399
        %v459 = vunpack.c.l.b16 %v400
        %v460 = vunpack.c.h.b16 %v400
        %v461 = vunpack.c.l.b16 %v401
        %v462 = vunpack.c.h.b16 %v401
        %v463 = vunpack.c.l.b16 %v402
        %v464 = vunpack.c.h.b16 %v402
        %v465 = vunpack.c.l.b16 %v403
        %v466 = vunpack.c.h.b16 %v403
        %v467 = vunpack.c.l.b16 %v404
        %v468 = vunpack.c.h.b16 %v404
        %v469 = vunpack.c.l.b16 %v405
        %v470 = vunpack.c.h.b16 %v405
        %v471 = vunpack.c.l.b16 %v406
        %v472 = vunpack.c.h.b16 %v406
        %v473 = vunpack.c.l.b16 %v407
        %v474 = vunpack.c.h.b16 %v407
        %v475 = vunpack.c.l.b16 %v408
        %v476 = vunpack.c.h.b16 %v408
        %v477 = vunpack.c.l.b16 %v409
        %v478 = vunpack.c.h.b16 %v409
        %v479 = vunpack.c.l.b16 %v410
        %v480 = vunpack.c.h.b16 %v410
        %v481 = vunpack.c.l.b16 %v411
        %v482 = vunpack.c.h.b16 %v411
        %v483 = vunpack.c.l.b16 %v412
        %v484 = vunpack.c.h.b16 %v412
        %v485 = vpack.c.b16 %v455, %v453
        %v486 = vpack.c.b16 %v456, %v454
        %v487 = vpack.c.b16 %v459, %v457
        %v488 = vpack.c.b16 %v460, %v458
        %v489 = vpack.c.b16 %v463, %v461
        %v490 = vpack.c.b16 %v464, %v462
        %v491 = vpack.c.b16 %v467, %v465
        %v492 = vpack.c.b16 %v468, %v466
        %v493 = vpack.c.b16 %v471, %v469
        %v494 = vpack.c.b16 %v472, %v470
        %v495 = vpack.c.b16 %v475, %v473
        %v496 = vpack.c.b16 %v476, %v474
        %v497 = vpack.c.b16 %v479, %v477
        %v498 = vpack.c.b16 %v480, %v478
        %v499 = vpack.c.b16 %v483, %v481
        %v500 = vpack.c.b16 %v484, %v482
        %517 = vmatprep.subr.bf16.mxu0 %v486
        %518 = vmatpush1.bf16.msra.mxu0 %v485
        %519 = vmatprep.subr.bf16.mxu0 %v488
        %520 = vmatpush1.bf16.msra.mxu0 %v487
        %521 = vmatprep.subr.bf16.mxu0 %v490
        %522 = vmatpush1.bf16.msra.mxu0 %v489
        %523 = vmatprep.subr.bf16.mxu0 %v492
        %524 = vmatpush1.bf16.msra.mxu0 %v491
        %525 = vmatprep.subr.bf16.mxu0 %v494
        %526 = vmatpush1.bf16.msra.mxu0 %v493
        %527 = vmatprep.subr.bf16.mxu0 %v496
        %528 = vmatpush1.bf16.msra.mxu0 %v495
        %529 = vmatprep.subr.bf16.mxu0 %v498
        %530 = vmatpush1.bf16.msra.mxu0 %v497
        %531 = vmatprep.subr.bf16.mxu0 %v500
        %532 = vmatpush1.bf16.msra.mxu0 %v499
        %533 = vmatprep.subr.bf16.mxu0 0
        %534 = vmatpush1.bf16.msra.mxu0 0
        %535 = vmatprep.subr.bf16.mxu0 0
        %536 = vmatpush1.bf16.msra.mxu0 0
        %537 = vmatprep.subr.bf16.mxu0 0
        %538 = vmatpush1.bf16.msra.mxu0 0
        %539 = vmatprep.subr.bf16.mxu0 0
        %540 = vmatpush1.bf16.msra.mxu0 0
        %541 = vmatprep.subr.bf16.mxu0 0
        %542 = vmatpush1.bf16.msra.mxu0 0
        %543 = vmatprep.subr.bf16.mxu0 0
        %544 = vmatpush1.bf16.msra.mxu0 0
        %545 = vmatprep.subr.bf16.mxu0 0
        %546 = vmatpush1.bf16.msra.mxu0 0
        %547 = vmatprep.subr.bf16.mxu0 0
        %548 = vmatpush1.bf16.msra.mxu0 0
        %549 = vmatprep.mubr.bf16.mxu0 0
        %550 = vmatmul.mubr.bf16.gmra.mrb[0].mxu0 %v433
        %v551 = vpop.f32.mrb[0].mxu0
        %v552 = vadd.f32 %v418, %v551
        %v553 = vpop.f32.mrb[0].mxu0
        %v554 = vadd.f32 %v422, %v553
        %v555 = vpop.f32.mrb[0].mxu0
        %v556 = vadd.f32 %v418, %v555
        %v557 = vpop.f32.mrb[0].mxu0
        %v558 = vadd.f32 %v422, %v557
        %559 = vmatprep.mubr.bf16.mxu0 0
        %560 = vmatmul.mubr.bf16.gmra.mrb[0].mxu0 %v434
        %v561 = vpop.f32.mrb[0].mxu0
        %v562 = vadd.f32 %v418, %v561
        %v563 = vpop.f32.mrb[0].mxu0
        %v564 = vadd.f32 %v422, %v563
        %v565 = vpop.f32.mrb[0].mxu0
        %v566 = vadd.f32 %v418, %v565
        %v567 = vpop.f32.mrb[0].mxu0
        %v568 = vadd.f32 %v422, %v567
        %569 = vdwg.mxu0
        %v570 = vmax.f32 %v552, 0.0
        %v571 = vmax.f32 %v554, 0.0
        %v572 = vmax.f32 %v556, 0.0
        %v573 = vmax.f32 %v558, 0.0
        %v574 = vmax.f32 %v562, 0.0
        %v575 = vmax.f32 %v564, 0.0
        %v576 = vmax.f32 %v566, 0.0
        %v577 = vmax.f32 %v568, 0.0
        %v578 = vpack.c.bf16 %v572, %v570
        %v579 = vpack.c.bf16 %v573, %v571
        %v580 = vpack.c.bf16 %v576, %v574
        %v581 = vpack.c.bf16 %v577, %v575
        %v586 = vunpack.c.l.b16 %v578
        %v587 = vunpack.c.l.b16 %v579
        %v588 = vunpack.c.h.b16 %v578
        %v589 = vunpack.c.h.b16 %v579
        %v590 = vunpack.c.l.b16 %v580
        %v591 = vunpack.c.l.b16 %v581
        %v592 = vunpack.c.h.b16 %v580
        %v593 = vunpack.c.h.b16 %v581
        %v594 = vpack.c.b16 %v587, %v586
        %v595 = vpack.c.b16 %v589, %v588
        %v596 = vpack.c.b16 %v591, %v590
        %v597 = vpack.c.b16 %v593, %v592
        %602 = vst [vmem:[%s352] sm:$0xff] %v594
        %603 = vst [vmem:[%s352 + $0x8] sm:$0xff] %v595
        %604 = vst [vmem:[%s352 + $0x10] sm:$0xff] %v596
        %605 = vst [vmem:[%s352 + $0x18] sm:$0xff] %v597
        %p606 = scmp.ne.s32.totalorder %s23, 0
        // Predicated region
        $region71: #{time_delay_layer_v4_forward.2} parent=65 // pred_check
          %p607 = pneg %p606
        $region72: #{time_delay_layer_v4_forward.2} parent=65 // pred_check_branch
          %609 = sbr.rel (%p607) target = $region74
        $region73: #{time_delay_layer_v4_forward.2} parent=65 // pred_region
          %v610 = vadd.f32 %v570, %v572
          %v611 = vadd.f32 %v610, %v574
          %v612 = vadd.f32 %v611, %v576
          %v613 = vrot.slane %v612, 4
          %v614 = vadd.f32 %v612, %v613
          %v615 = vrot.slane %v614, 2
          %v616 = vadd.f32 %v614, %v615
          %v617 = vrot.slane %v616, 1
          %v618 = vadd.f32 %v616, %v617
          %v619 = vadd.f32 %v571, %v573
          %v620 = vadd.f32 %v619, %v575
          %v621 = vadd.f32 %v620, %v577
          %v622 = vrot.slane %v621, 4
          %v623 = vadd.f32 %v621, %v622
          %v624 = vrot.slane %v623, 2
          %v625 = vadd.f32 %v623, %v624
          %v626 = vrot.slane %v625, 1
          %v627 = vadd.f32 %v625, %v626
          %v628 = vmul.f32 %v570, %v570
          %v629 = vmul.f32 %v571, %v571
          %v630 = vmul.f32 %v572, %v572
          %v631 = vmul.f32 %v573, %v573
          %v632 = vmul.f32 %v574, %v574
          %v633 = vmul.f32 %v575, %v575
          %v634 = vmul.f32 %v576, %v576
          %v635 = vmul.f32 %v577, %v577
          %v636 = vadd.f32 %v628, %v630
          %v637 = vadd.f32 %v636, %v632
          %v638 = vadd.f32 %v637, %v634
          %v639 = vrot.slane %v638, 4
          %v640 = vadd.f32 %v638, %v639
          %v641 = vrot.slane %v640, 2
          %v642 = vadd.f32 %v640, %v641
          %v643 = vrot.slane %v642, 1
          %v644 = vadd.f32 %v642, %v643
          %v645 = vadd.f32 %v629, %v631
          %v646 = vadd.f32 %v645, %v633
          %v647 = vadd.f32 %v646, %v635
          %v648 = vrot.slane %v647, 4
          %v649 = vadd.f32 %v647, %v648
          %v650 = vrot.slane %v649, 2
          %v651 = vadd.f32 %v649, %v650
          %v652 = vrot.slane %v651, 1
          %v653 = vadd.f32 %v651, %v652
          %vm654 = vcmask 1040384
          %v655 = vsel %vm654, %v618, %v644
          %v656 = vsel %vm654, %v627, %v653
          %p657 = scmp.eq.s32.totalorder %s23, 0
          // Predicated region
          $region75: #{time_delay_layer_v4_forward.2} parent=73 // pred_check
            %p658 = pneg %p657
          $region76: #{time_delay_layer_v4_forward.2} parent=73 // pred_check_branch
            %660 = sbr.rel (%p658) target = $region78
          $region77: #{time_delay_layer_v4_forward.2} parent=73 // pred_region
            %v663 = vcombine.low %v655, %v656
            %v665 = vunpack.c.l.s4 1983009808
            %v666 = vunpack.c.0.s8 %v665
            %v667 = vlaneseq
            %v668 = vshrl.u32 %v667, 7
            %v669 = vsub.s32 %v666, %v668
            %v670 = vrot.slane %v663, %v669
            %672 = vst [vmem:[%s390] sm:$0xf] %v670
          $region78: #{time_delay_layer_v4_forward.2} parent=73 // pred_fallthru
            _
          %v673 = vld [vmem:[%s390] sm:$0xf]
          %v676 = vcombine.low %v655, %v656
          %v678 = vunpack.c.l.s4 1983009808
          %v679 = vunpack.c.0.s8 %v678
          %v680 = vlaneseq
          %v681 = vshrl.u32 %v680, 7
          %v682 = vsub.s32 %v679, %v681
          %v683 = vrot.slane %v676, %v682
          %v685 = vadd.f32 %v673, %v683
          %686 = vst [vmem:[%s390] sm:$0xf] %v685
        $region74: #{time_delay_layer_v4_forward.2} parent=65 // pred_fallthru
          _
        %p687 = scmp.eq.s32.totalorder %s23, 0
        // Predicated region
        $region79: #{time_delay_layer_v4_forward.2} parent=65 // pred_check
          %p688 = pneg %p687
        $region80: #{time_delay_layer_v4_forward.2} parent=65 // pred_check_branch
          %690 = sbr.rel (%p688) target = $region82
        $region81: #{time_delay_layer_v4_forward.2} parent=65 // pred_region
          %v691 = vlaneseq
          %v692 = vshrl.u32 %v691, 7
          %v693 = vadd.s32 %v692, 8
          %v694 = vadd.s32 %v692, 16
          %v695 = vadd.s32 %v692, 24
          %vm696 = vcmp.lt.s32.totalorder %v692, 28
          %vm697 = vcmp.lt.s32.totalorder %v693, 28
          %vm698 = vcmp.lt.s32.totalorder %v694, 28
          %vm699 = vcmp.lt.s32.totalorder %v695, 28
          %v700 = vsel %vm696, 1, 0
          %v701 = vsel %vm697, 1, 0
          %v702 = vsel %vm698, 1, 0
          %v703 = vsel %vm699, 1, 0
          %vm704 = vcmp.eq.s32.totalorder %v700, 1
          %vm705 = vcmp.eq.s32.totalorder %v701, 1
          %vm706 = vcmp.eq.s32.totalorder %v702, 1
          %vm707 = vcmp.eq.s32.totalorder %v703, 1
          %v708 = vsel %vm704, %v570, 0.0
          %v709 = vsel %vm704, %v571, 0.0
          %v710 = vsel %vm705, %v572, 0.0
          %v711 = vsel %vm705, %v573, 0.0
          %v712 = vsel %vm706, %v574, 0.0
          %v713 = vsel %vm706, %v575, 0.0
          %v714 = vsel %vm707, %v576, 0.0
          %v715 = vsel %vm707, %v577, 0.0
          %v716 = vadd.f32 %v708, %v710
          %v717 = vadd.f32 %v716, %v712
          %v718 = vadd.f32 %v717, %v714
          %v719 = vrot.slane %v718, 4
          %v720 = vadd.f32 %v718, %v719
          %v721 = vrot.slane %v720, 2
          %v722 = vadd.f32 %v720, %v721
          %v723 = vrot.slane %v722, 1
          %v724 = vadd.f32 %v722, %v723
          %v725 = vadd.f32 %v709, %v711
          %v726 = vadd.f32 %v725, %v713
          %v727 = vadd.f32 %v726, %v715
          %v728 = vrot.slane %v727, 4
          %v729 = vadd.f32 %v727, %v728
          %v730 = vrot.slane %v729, 2
          %v731 = vadd.f32 %v729, %v730
          %v732 = vrot.slane %v731, 1
          %v733 = vadd.f32 %v731, %v732
          %v734 = vmul.f32 %v708, %v708
          %v735 = vmul.f32 %v709, %v709
          %v736 = vmul.f32 %v710, %v710
          %v737 = vmul.f32 %v711, %v711
          %v738 = vmul.f32 %v712, %v712
          %v739 = vmul.f32 %v713, %v713
          %v740 = vmul.f32 %v714, %v714
          %v741 = vmul.f32 %v715, %v715
          %v742 = vadd.f32 %v734, %v736
          %v743 = vadd.f32 %v742, %v738
          %v744 = vadd.f32 %v743, %v740
          %v745 = vrot.slane %v744, 4
          %v746 = vadd.f32 %v744, %v745
          %v747 = vrot.slane %v746, 2
          %v748 = vadd.f32 %v746, %v747
          %v749 = vrot.slane %v748, 1
          %v750 = vadd.f32 %v748, %v749
          %v751 = vadd.f32 %v735, %v737
          %v752 = vadd.f32 %v751, %v739
          %v753 = vadd.f32 %v752, %v741
          %v754 = vrot.slane %v753, 4
          %v755 = vadd.f32 %v753, %v754
          %v756 = vrot.slane %v755, 2
          %v757 = vadd.f32 %v755, %v756
          %v758 = vrot.slane %v757, 1
          %v759 = vadd.f32 %v757, %v758
          %vm760 = vcmask 1040384
          %v761 = vsel %vm760, %v724, %v750
          %v762 = vsel %vm760, %v733, %v759
          %v765 = vcombine.low %v761, %v762
          %v767 = vunpack.c.l.s4 1983009808
          %v768 = vunpack.c.0.s8 %v767
          %v769 = vlaneseq
          %v770 = vshrl.u32 %v769, 7
          %v771 = vsub.s32 %v768, %v770
          %v772 = vrot.slane %v765, %v771
          %774 = vst [vmem:[%s390] sm:$0xf] %v772
          // Predicated region
          $region83: #{time_delay_layer_v4_forward.2} parent=81 // pred_check
            %p775 = pneg %p606
          $region84: #{time_delay_layer_v4_forward.2} parent=81 // pred_check_branch
            %777 = sbr.rel (%p775) target = $region86
          $region85: #{time_delay_layer_v4_forward.2} parent=81 // pred_region
            %v778 = vld [vmem:[%s390] sm:$0xf]
            %v779 = vadd.f32 %v778, %v772
            %780 = vst [vmem:[%s390] sm:$0xf] %v779
          $region86: #{time_delay_layer_v4_forward.2} parent=81 // pred_fallthru
            _
        $region82: #{time_delay_layer_v4_forward.2} parent=65 // pred_fallthru
          _
        %s781 = sand.u32 %s127, 1
        %s782 = sand.u32 %s127, 1
        %s783 = smul.addr %s782, 32
        %s784 = scalar_lea.vmem [#allocation3], %s783
        %s785 = smul.u32 2, %s22
        %p786 = scmp.lt.s32.totalorder %s21, 1
        %s787 = scalar_select %p786, %s21, 1
        %p788 = scmp.lt.s32.totalorder %s785, 3
        %s789 = scalar_select %p788, %s785, 3
        %s790 = smul.addr %s787, 4
        %s791 = sadd.s32 %s789, %s790
        %s792 = smul.addr %s791, 2
        %s793 = scalar_lea.vmem %s4, %s792
        // Predicated region
        $region87: #{time_delay_layer_v4_forward.2} parent=65 // pred_check
          %p794 = pneg %p137
        $region88: #{time_delay_layer_v4_forward.2} parent=65 // pred_check_branch
          %796 = sbr.rel (%p794) target = $region90
        $region89: #{time_delay_layer_v4_forward.2} parent=65 // pred_region
          %s797 = smul.u32 4, %s23
          %s798 = smul.u32 2, %s22
          %s799 = smul.addr %s797, 4
          %s800 = sadd.s32 %s798, %s799
          %s801 = smul.addr %s21, 16
          %s802 = sadd.s32 %s800, %s801
          %s803 = smul.addr %s802, 4
          %s804 = scalar_lea.vmem %s3, %s803
          // Predicated region
          $region91: #{time_delay_layer_v4_forward.2} parent=89 // pred_check
            _
          $region92: #{time_delay_layer_v4_forward.2} parent=89 // pred_check_branch
            %806 = sbr.rel (0) target = $region94
          $region93: #{time_delay_layer_v4_forward.2} parent=89 // pred_region
            // Predicated region
            $region95: #{time_delay_layer_v4_forward.2} parent=93 // pred_check
              _
            $region96: #{time_delay_layer_v4_forward.2} parent=93 // pred_check_branch
              %808 = sbr.rel (0) target = $region98
            $region97: #{time_delay_layer_v4_forward.2} parent=93 // pred_region
              // Predicated region
              $region110: #{time_delay_layer_v4_forward.2} parent=97 // pred_check
                _
              $region111: #{time_delay_layer_v4_forward.2} parent=97 // pred_check_branch
                %829 = sbr.rel (0) target = $region113
              $region112: #{time_delay_layer_v4_forward.2} parent=97 // pred_region
                loop: start=0, step=1, limit=1
                $region114: #{time_delay_layer_v4_forward.2} parent=112 // loop_pre_header
                  _
                $region115: #{time_delay_layer_v4_forward.2} parent=112 // loop_header
                  %s831 = sphi 0, %s835
                  %p832 = scmp.ge.s32.totalorder %s831, 1
                  %s836 = sphi %s784, %s784
                  %s837 = sphi %s804, %s804
                $region116: #{time_delay_layer_v4_forward.2} parent=112 // loop_header_branch
                  %834 = sbr.rel (%p832) target = $region120
                $region117: #{time_delay_layer_v4_forward.2} parent=112 // loop_body
                  %v838 = vld [vmem:[%s836] sm:$0xff]
                  %839 = vst [vmem:[%s837] sm:$0xff] %v838
                  %v840 = vld [vmem:[%s836 + $0x8] sm:$0xff]
                  %841 = vst [vmem:[%s837 + $0x10] sm:$0xff] %v840
                  %v842 = vld [vmem:[%s836 + $0x10] sm:$0xff]
                  %843 = vst [vmem:[%s837 + $0x20] sm:$0xff] %v842
                  %v844 = vld [vmem:[%s836 + $0x18] sm:$0xff]
                  %845 = vst [vmem:[%s837 + $0x30] sm:$0xff] %v844
                $region118: #{time_delay_layer_v4_forward.2} parent=112 // loop_footer
                  %s835 = sadd.s32 1, %s831
                $region119: #{time_delay_layer_v4_forward.2} parent=112 // loop_footer_branch
                  %830 = sbr.rel target = $region115
                $region120: #{time_delay_layer_v4_forward.2} parent=112 // loop_exit
                  _
              $region113: #{time_delay_layer_v4_forward.2} parent=97 // pred_fallthru
                _
              // Predicated region
              $region121: #{time_delay_layer_v4_forward.2} parent=97 // pred_check
                _
              $region122: #{time_delay_layer_v4_forward.2} parent=97 // pred_check_branch
                %847 = sbr.rel target = $region124
              $region123: #{time_delay_layer_v4_forward.2} parent=97 // pred_region
                _
              $region124: #{time_delay_layer_v4_forward.2} parent=97 // pred_fallthru
                _
            $region98: #{time_delay_layer_v4_forward.2} parent=93 // pred_fallthru
              _
            // Predicated region
            $region99: #{time_delay_layer_v4_forward.2} parent=93 // pred_check
              _
            $region100: #{time_delay_layer_v4_forward.2} parent=93 // pred_check_branch
              %810 = sbr.rel target = $region102
            $region101: #{time_delay_layer_v4_forward.2} parent=93 // pred_region
              loop: start=0, step=1, limit=1
              $region103: #{time_delay_layer_v4_forward.2} parent=101 // loop_pre_header
                _
              $region104: #{time_delay_layer_v4_forward.2} parent=101 // loop_header
                %s813 = sphi 0, %s817
                %p814 = scmp.ge.s32.totalorder %s813, 1
                %s818 = sphi %s784, %s784
                %s819 = sphi %s804, %s804
              $region105: #{time_delay_layer_v4_forward.2} parent=101 // loop_header_branch
                %816 = sbr.rel (%p814) target = $region109
              $region106: #{time_delay_layer_v4_forward.2} parent=101 // loop_body
                %v820 = vld [vmem:[%s818] sm:$0xff]
                %821 = vst [vmem:[%s819] sm:$0xff] %v820
                %v822 = vld [vmem:[%s818 + $0x8] sm:$0xff]
                %823 = vst [vmem:[%s819 + $0x10] sm:$0xff] %v822
                %v824 = vld [vmem:[%s818 + $0x10] sm:$0xff]
                %825 = vst [vmem:[%s819 + $0x20] sm:$0xff] %v824
                %v826 = vld [vmem:[%s818 + $0x18] sm:$0xff]
                %827 = vst [vmem:[%s819 + $0x30] sm:$0xff] %v826
              $region107: #{time_delay_layer_v4_forward.2} parent=101 // loop_footer
                %s817 = sadd.s32 1, %s813
              $region108: #{time_delay_layer_v4_forward.2} parent=101 // loop_footer_branch
                %812 = sbr.rel target = $region104
              $region109: #{time_delay_layer_v4_forward.2} parent=101 // loop_exit
                _
            $region102: #{time_delay_layer_v4_forward.2} parent=93 // pred_fallthru
              _
          $region94: #{time_delay_layer_v4_forward.2} parent=89 // pred_fallthru
            _
          %848 = vnop
        $region90: #{time_delay_layer_v4_forward.2} parent=65 // pred_fallthru
          _
        // Predicated region
        $region125: #{time_delay_layer_v4_forward.2} parent=65 // pred_check
          %p849 = pneg %p165
        $region126: #{time_delay_layer_v4_forward.2} parent=65 // pred_check_branch
          %851 = sbr.rel (%p849) target = $region128
        $region127: #{time_delay_layer_v4_forward.2} parent=65 // pred_region
          %s852 = smul.u32 2, %s22
        $region128: #{time_delay_layer_v4_forward.2} parent=65 // pred_fallthru
          _
      $region66: #{time_delay_layer_v4_forward.2} parent=5 // pred_fallthru
        _
      %p853 = scmp.le.s32.totalorder 2, %s11
      // Predicated region
      $region129: #{time_delay_layer_v4_forward.2} parent=5 // pred_check
        %p854 = pneg %p853
      $region130: #{time_delay_layer_v4_forward.2} parent=5 // pred_check_branch
        %856 = sbr.rel (%p854) target = $region132
      $region131: #{time_delay_layer_v4_forward.2} parent=5 // pred_region
        %s857 = ssub.s32 %s11, 2
        // Predicated region
        $region133: #{time_delay_layer_v4_forward.2} parent=131 // pred_check
          %p858 = pneg %p143
        $region134: #{time_delay_layer_v4_forward.2} parent=131 // pred_check_branch
          %860 = sbr.rel (%p858) target = $region136
        $region135: #{time_delay_layer_v4_forward.2} parent=131 // pred_region
          %s861 = sand.u32 %s128, 1
          %s862 = sand.u32 %s128, 1
          %s863 = smul.addr %s862, 32
          %s864 = scalar_lea.vmem [#allocation3], %s863
        $region136: #{time_delay_layer_v4_forward.2} parent=131 // pred_fallthru
          _
        // Predicated region
        $region137: #{time_delay_layer_v4_forward.2} parent=131 // pred_check
          %p865 = pneg %p171
        $region138: #{time_delay_layer_v4_forward.2} parent=131 // pred_check_branch
          %867 = sbr.rel (%p865) target = $region140
        $region139: #{time_delay_layer_v4_forward.2} parent=131 // pred_region
          %s868 = smul.u32 2, %s25
          %p869 = scmp.lt.s32.totalorder %s24, 1
          %s870 = scalar_select %p869, %s24, 1
          %p871 = scmp.lt.s32.totalorder %s868, 3
          %s872 = scalar_select %p871, %s868, 3
          %s873 = smul.addr %s870, 4
          %s874 = sadd.s32 %s872, %s873
          %s875 = smul.addr %s874, 2
          %s876 = scalar_lea.vmem %s4, %s875
        $region140: #{time_delay_layer_v4_forward.2} parent=131 // pred_fallthru
          _
      $region132: #{time_delay_layer_v4_forward.2} parent=5 // pred_fallthru
        _
    $region6: #{time_delay_layer_v4_forward.2} parent=1 // loop_footer
      %s15 = sadd.s32 1, %s11
    $region7: #{time_delay_layer_v4_forward.2} parent=1 // loop_footer_branch
      %10 = sbr.rel target = $region3
    $region8: #{time_delay_layer_v4_forward.2} parent=1 // loop_exit
      _

</llo_original>
